<compile_context>
chip_gen: v7x
topology: tpu7x:2x2x1
jax: 0.10.0
libtpu: 0.0.40
codegen_flags: <defaults>
</compile_context>

<pallas_src>
import jax
import jax.numpy as jnp
from jax import lax
from jax.experimental import pallas as pl
from jax.experimental.pallas import tpu as pltpu

_SQRT_HALF = 0.7071067811865476  # 1/sqrt(2)


def _gelu_exact(x):
    # PyTorch nn.GELU() default is the exact (erf) formulation.
    return 0.5 * x * (1.0 + lax.erf(x * _SQRT_HALF))


def mlp_kernel(x_ref, w1_ref, b1_ref, w2_ref, b2_ref, w3_ref, b3_ref, o_ref):
    # x_ref: (num_input, TILE_B)   -- batch on the lane axis
    # wN_ref: (out_features, in_features), bN_ref: (out_features, 1)
    x = x_ref[...]

    h = jnp.dot(w1_ref[...], x, preferred_element_type=jnp.float32) + b1_ref[...]
    h = _gelu_exact(h)

    h = jnp.dot(w2_ref[...], h, preferred_element_type=jnp.float32) + b2_ref[...]
    h = _gelu_exact(h)

    h = jnp.dot(w3_ref[...], h, preferred_element_type=jnp.float32) + b3_ref[...]

    # sigmoid: exp goes to the EUP; exact reciprocal keeps parity with the reference.
    # Output is lane-dense (num_output, TILE_B).
    o_ref[...] = pl.reciprocal(1.0 + jnp.exp(-h))


def mlp_forward(x, params, *, tile_b=1024):
    """x: (B, num_input) float32. params in PyTorch layout:
       (w1 (H,I), b1 (H,), w2 (H,H), b2 (H,), w3 (O,H), b3 (O,)).
       Returns (B,) float32 when num_output == 1 (matching torch.squeeze(x, dim=1)
       followed by sigmoid), else (B, num_output)."""
    w1, b1, w2, b2, w3, b3 = params
    B, num_input = x.shape
    num_hidden = w1.shape[0]
    num_output = w3.shape[0]

    # Batch tile: a multiple of the 128-lane width, no larger than needed.
    tile_b = max(128, min(tile_b, pl.cdiv(B, 128) * 128))
    b_pad = pl.cdiv(B, tile_b) * tile_b

    # Batch-on-lanes: (num_input, B), zero-padded batch.
    x_t = jnp.transpose(x)
    if b_pad != B:
        x_t = jnp.pad(x_t, ((0, 0), (0, b_pad - B)))

    b1c = b1.reshape(num_hidden, 1)
    b2c = b2.reshape(num_hidden, 1)
    b3c = b3.reshape(num_output, 1)

    def resident(shape):
        # Full-extent block, constant index_map: stays VMEM-resident across the grid.
        return pl.BlockSpec(shape, lambda i: (0, 0))

    out_t = pl.pallas_call(
        mlp_kernel,
        out_shape=jax.ShapeDtypeStruct((num_output, b_pad), jnp.float32),
        grid=(b_pad // tile_b,),
        in_specs=[
            pl.BlockSpec((num_input, tile_b), lambda i: (0, i)),   # x tile
            resident((num_hidden, num_input)),                     # w1
            resident((num_hidden, 1)),                             # b1
            resident((num_hidden, num_hidden)),                    # w2
            resident((num_hidden, 1)),                             # b2
            resident((num_output, num_hidden)),                    # w3
            resident((num_output, 1)),                             # b3
        ],
        out_specs=pl.BlockSpec((num_output, tile_b), lambda i: (0, i)),
        compiler_params=pltpu.CompilerParams(
            dimension_semantics=("parallel",),      # megacore sharding on v7x
            vmem_limit_bytes=32 * 1024 * 1024,      # headroom (v5e default is 16 MiB)
        ),
    )(x_t, w1, b1c, w2, b2c, w3, b3c)

    # torch.squeeze(x, dim=1): drops dim 1 only if it has size 1.
    if num_output == 1:
        return out_t[0, :B]                 # (B,)  -- no transpose needed
    return jnp.transpose(out_t[:, :B])      # (B, num_output)


def init_params(key, num_input, num_hidden, num_output):
    """Deterministic synthetic params in PyTorch nn.Linear layout (out, in) / (out,)."""
    ks = jax.random.split(key, 6)
    scale = 0.1
    w1 = scale * jax.random.normal(ks[0], (num_hidden, num_input), jnp.float32)
    b1 = scale * jax.random.normal(ks[1], (num_hidden,), jnp.float32)
    w2 = scale * jax.random.normal(ks[2], (num_hidden, num_hidden), jnp.float32)
    b2 = scale * jax.random.normal(ks[3], (num_hidden,), jnp.float32)
    w3 = scale * jax.random.normal(ks[4], (num_output, num_hidden), jnp.float32)
    b3 = scale * jax.random.normal(ks[5], (num_output,), jnp.float32)
    return (w1, b1, w2, b2, w3, b3)


def _reference(x, params):
    """Pure-JAX reference matching the PyTorch module (exact GELU, sigmoid)."""
    w1, b1, w2, b2, w3, b3 = params
    h = _gelu_exact(x @ w1.T + b1)
    h = _gelu_exact(h @ w2.T + b2)
    h = h @ w3.T + b3
    if h.shape[1] == 1:
        h = h[:, 0]
    return jax.nn.sigmoid(h)


if __name__ == "__main__":
    B, NUM_INPUT, NUM_HIDDEN, NUM_OUTPUT = 8, 16, 32, 1

    key = jax.random.PRNGKey(0)
    k_x, k_p = jax.random.split(key)
    x = jax.random.normal(k_x, (B, NUM_INPUT), jnp.float32)
    params = init_params(k_p, NUM_INPUT, NUM_HIDDEN, NUM_OUTPUT)

    y = mlp_forward(x, params)
    jax.block_until_ready(y)
    assert y.shape == (B,), y.shape

    y_ref = _reference(x, params)
    assert jnp.allclose(y, y_ref, atol=1e-5, rtol=1e-5), float(jnp.max(jnp.abs(y - y_ref)))

    print("KERNEL_OK")
</pallas_src>

<mosaic_0001>
module attributes {stable_mosaic.version = 11 : i64} {
  func.func @mlp_kernel(%arg0: i32, %arg1: memref<16x128xf32, #tpu.memory_space<vmem>>, %arg2: memref<32x16xf32, #tpu.memory_space<vmem>>, %arg3: memref<32x1xf32, #tpu.memory_space<vmem>>, %arg4: memref<32x32xf32, #tpu.memory_space<vmem>>, %arg5: memref<32x1xf32, #tpu.memory_space<vmem>>, %arg6: memref<1x32xf32, #tpu.memory_space<vmem>>, %arg7: memref<1x1xf32, #tpu.memory_space<vmem>>, %arg8: memref<1x128xf32, #tpu.memory_space<vmem>>) attributes {dimension_semantics = [#tpu.dimension_semantics<parallel>], iteration_bounds = array<i64: 1>, scalar_prefetch = 0 : i64, scratch_operands = 0 : i64, tpu.core_type = #tpu.core_type<tc>, window_params = [{transform_indices = @transform_0, window_bounds = array<i64: 16, 128>}, {pipeline_mode = #tpu.pipeline_mode<synchronous>, transform_indices = @transform_1, window_bounds = array<i64: 32, 16>}, {pipeline_mode = #tpu.pipeline_mode<synchronous>, transform_indices = @transform_2, window_bounds = array<i64: 32, 1>}, {pipeline_mode = #tpu.pipeline_mode<synchronous>, transform_indices = @transform_3, window_bounds = array<i64: 32, 32>}, {pipeline_mode = #tpu.pipeline_mode<synchronous>, transform_indices = @transform_4, window_bounds = array<i64: 32, 1>}, {pipeline_mode = #tpu.pipeline_mode<synchronous>, transform_indices = @transform_5, window_bounds = array<i64: 1, 32>}, {pipeline_mode = #tpu.pipeline_mode<synchronous>, transform_indices = @transform_6, window_bounds = array<i64: 1, 1>}, {transform_indices = @transform_7, window_bounds = array<i64: 1, 128>}]} {
    %c0 = arith.constant 0 : index
    %c0_0 = arith.constant 0 : index
    %0 = vector.load %arg1[%c0, %c0_0] : memref<16x128xf32, #tpu.memory_space<vmem>>, vector<16x128xf32>
    %c0_1 = arith.constant 0 : index
    %c0_2 = arith.constant 0 : index
    %1 = vector.load %arg2[%c0_1, %c0_2] : memref<32x16xf32, #tpu.memory_space<vmem>>, vector<32x16xf32>
    %cst = arith.constant dense<0.000000e+00> : vector<32x128xf32>
    %2 = tpu.matmul %1, %0, %cst {dimension_numbers = #tpu.dot_dimension_numbers<[1], [0], [0], [1], [0, 0, 1, 1], [], []>} : vector<32x16xf32>, vector<16x128xf32>, vector<32x128xf32> -> vector<32x128xf32>
    %c0_3 = arith.constant 0 : index
    %c0_4 = arith.constant 0 : index
    %3 = vector.load %arg3[%c0_3, %c0_4] : memref<32x1xf32, #tpu.memory_space<vmem>>, vector<32x1xf32>
    %4 = vector.broadcast %3 : vector<32x1xf32> to vector<32x128xf32>
    %5 = arith.addf %2, %4 : vector<32x128xf32>
    %cst_5 = arith.constant 5.000000e-01 : f32
    %6 = vector.broadcast %cst_5 : f32 to vector<32x128xf32>
    %7 = arith.mulf %6, %5 : vector<32x128xf32>
    %cst_6 = arith.constant 0.707106769 : f32
    %8 = vector.broadcast %cst_6 : f32 to vector<32x128xf32>
    %9 = arith.mulf %5, %8 : vector<32x128xf32>
    %10 = math.erf %9 : vector<32x128xf32>
    %cst_7 = arith.constant 1.000000e+00 : f32
    %11 = vector.broadcast %cst_7 : f32 to vector<32x128xf32>
    %12 = arith.addf %11, %10 : vector<32x128xf32>
    %13 = arith.mulf %7, %12 : vector<32x128xf32>
    %c0_8 = arith.constant 0 : index
    %c0_9 = arith.constant 0 : index
    %14 = vector.load %arg4[%c0_8, %c0_9] : memref<32x32xf32, #tpu.memory_space<vmem>>, vector<32x32xf32>
    %cst_10 = arith.constant dense<0.000000e+00> : vector<32x128xf32>
    %15 = tpu.matmul %14, %13, %cst_10 {dimension_numbers = #tpu.dot_dimension_numbers<[1], [0], [0], [1], [0, 0, 1, 1], [], []>} : vector<32x32xf32>, vector<32x128xf32>, vector<32x128xf32> -> vector<32x128xf32>
    %c0_11 = arith.constant 0 : index
    %c0_12 = arith.constant 0 : index
    %16 = vector.load %arg5[%c0_11, %c0_12] : memref<32x1xf32, #tpu.memory_space<vmem>>, vector<32x1xf32>
    %17 = vector.broadcast %16 : vector<32x1xf32> to vector<32x128xf32>
    %18 = arith.addf %15, %17 : vector<32x128xf32>
    %cst_13 = arith.constant 5.000000e-01 : f32
    %19 = vector.broadcast %cst_13 : f32 to vector<32x128xf32>
    %20 = arith.mulf %19, %18 : vector<32x128xf32>
    %cst_14 = arith.constant 0.707106769 : f32
    %21 = vector.broadcast %cst_14 : f32 to vector<32x128xf32>
    %22 = arith.mulf %18, %21 : vector<32x128xf32>
    %23 = math.erf %22 : vector<32x128xf32>
    %cst_15 = arith.constant 1.000000e+00 : f32
    %24 = vector.broadcast %cst_15 : f32 to vector<32x128xf32>
    %25 = arith.addf %24, %23 : vector<32x128xf32>
    %26 = arith.mulf %20, %25 : vector<32x128xf32>
    %c0_16 = arith.constant 0 : index
    %c0_17 = arith.constant 0 : index
    %27 = vector.load %arg6[%c0_16, %c0_17] : memref<1x32xf32, #tpu.memory_space<vmem>>, vector<1x32xf32>
    %cst_18 = arith.constant dense<0.000000e+00> : vector<1x128xf32>
    %28 = tpu.matmul %27, %26, %cst_18 {dimension_numbers = #tpu.dot_dimension_numbers<[1], [0], [0], [1], [0, 0, 1, 1], [], []>} : vector<1x32xf32>, vector<32x128xf32>, vector<1x128xf32> -> vector<1x128xf32>
    %c0_19 = arith.constant 0 : index
    %c0_20 = arith.constant 0 : index
    %29 = vector.load %arg7[%c0_19, %c0_20] : memref<1x1xf32, #tpu.memory_space<vmem>>, vector<1x1xf32>
    %30 = vector.broadcast %29 : vector<1x1xf32> to vector<1x128xf32>
    %31 = arith.addf %28, %30 : vector<1x128xf32>
    %cst_21 = arith.constant 0.000000e+00 : f32
    %32 = vector.broadcast %cst_21 : f32 to vector<1x128xf32>
    %33 = arith.subf %32, %31 : vector<1x128xf32>
    %34 = math.exp %33 : vector<1x128xf32>
    %cst_22 = arith.constant 1.000000e+00 : f32
    %35 = vector.broadcast %cst_22 : f32 to vector<1x128xf32>
    %36 = arith.addf %35, %34 : vector<1x128xf32>
    %37 = tpu.reciprocal %36 : vector<1x128xf32> -> vector<1x128xf32>
    %c0_23 = arith.constant 0 : index
    %c0_24 = arith.constant 0 : index
    %38 = vector.load %arg8[%c0_23, %c0_24] : memref<1x128xf32, #tpu.memory_space<vmem>>, vector<1x128xf32>
    tpu.vector_store %arg8[%c0_23, %c0_24], %37 {strides = array<i32>} : memref<1x128xf32, #tpu.memory_space<vmem>>, vector<1x128xf32>,
    return
  }
  func.func @transform_0(%arg0: i32) -> (i32, i32) {
    %c0_i32 = arith.constant 0 : i32
    %c0_i32_0 = arith.constant 0 : i32
    return %c0_i32, %arg0 : i32, i32
  }
  func.func @transform_1(%arg0: i32) -> (i32, i32) {
    %c0_i32 = arith.constant 0 : i32
    %c0_i32_0 = arith.constant 0 : i32
    %c0_i32_1 = arith.constant 0 : i32
    return %c0_i32, %c0_i32_0 : i32, i32
  }
  func.func @transform_2(%arg0: i32) -> (i32, i32) {
    %c0_i32 = arith.constant 0 : i32
    %c0_i32_0 = arith.constant 0 : i32
    %c0_i32_1 = arith.constant 0 : i32
    return %c0_i32, %c0_i32_0 : i32, i32
  }
  func.func @transform_3(%arg0: i32) -> (i32, i32) {
    %c0_i32 = arith.constant 0 : i32
    %c0_i32_0 = arith.constant 0 : i32
    %c0_i32_1 = arith.constant 0 : i32
    return %c0_i32, %c0_i32_0 : i32, i32
  }
  func.func @transform_4(%arg0: i32) -> (i32, i32) {
    %c0_i32 = arith.constant 0 : i32
    %c0_i32_0 = arith.constant 0 : i32
    %c0_i32_1 = arith.constant 0 : i32
    return %c0_i32, %c0_i32_0 : i32, i32
  }
  func.func @transform_5(%arg0: i32) -> (i32, i32) {
    %c0_i32 = arith.constant 0 : i32
    %c0_i32_0 = arith.constant 0 : i32
    %c0_i32_1 = arith.constant 0 : i32
    return %c0_i32, %c0_i32_0 : i32, i32
  }
  func.func @transform_6(%arg0: i32) -> (i32, i32) {
    %c0_i32 = arith.constant 0 : i32
    %c0_i32_0 = arith.constant 0 : i32
    %c0_i32_1 = arith.constant 0 : i32
    return %c0_i32, %c0_i32_0 : i32, i32
  }
  func.func @transform_7(%arg0: i32) -> (i32, i32) {
    %c0_i32 = arith.constant 0 : i32
    %c0_i32_0 = arith.constant 0 : i32
    return %c0_i32, %arg0 : i32, i32
  }
}

</mosaic_0001>

<llo_original>
// kernel: tpu_custom_call.1
$region0: #{tpu_custom_call.1}
  #allocation0 [shape = 'u32[]', space=smem, size = 0x4, offset = 0x4, fixed_abs, tag = 'smem constant byte address 0x4 - core index']
  #allocation1 [shape = 'u32[144,128]{1,0:T(1,128)}', space=vmem, size = 0x12000, scoped, tag = 'internal scratch']
  #allocation2 [shape = 'f32[1,1]{1,0:T(1,128)S(1)}', space=vmem, size = 0x200, scoped, tag = 'scoped memory for tpu_custom_call.1']
  %s0 = inlined_call_operand.vmem [shape: f32[16,128], index: 0, kind: input, shape index: {}]
  %s1 = inlined_call_operand.vmem [shape: f32[32,16], index: 1, kind: input, shape index: {}]
  %s2 = inlined_call_operand.vmem [shape: f32[32,1], index: 2, kind: input, shape index: {}]
  %s3 = inlined_call_operand.vmem [shape: f32[32,32], index: 3, kind: input, shape index: {}]
  %s4 = inlined_call_operand.vmem [shape: f32[32,1], index: 4, kind: input, shape index: {}]
  %s5 = inlined_call_operand.vmem [shape: f32[1,32], index: 5, kind: input, shape index: {}]
  %s6 = inlined_call_operand.<no memory space> [shape: f32[1,1], index: 6, kind: input, shape index: {}]
  %s7 = inlined_call_operand.hbm [shape: f32[1,128], index: 7, kind: output, shape index: {}]
  %s8 = sld [smem:[#allocation0]]
  $region38: #{tpu_custom_call.1} parent=0
    _
  %s10 = ssub.s32 1, %s8
  %s11 = scalar_select 0, %s10, %s8
  %v12 = vstv %s6
  %13 = vst [vmem:[#allocation2] sm:$0x1] %v12
  $region1: #{tpu_custom_call.1} parent=0
    #allocation3 [shape = 'u8[512]{0}', space=vmem, size = 0x400, scoped, tag = 'output window, operand 0, single buffered']
    #allocation4 [shape = 's32[1]{0}', space=sflag, size = 0x4, scoped, tag = 'scoped memory for tpu_custom_call.1']
    %14 = vsyncpa [#allocation4], 0
    // Predicated region
    $region2: #{tpu_custom_call.1} parent=1 // pred_check
      _
    $region3: #{tpu_custom_call.1} parent=1 // pred_check_branch
      %16 = sbr.rel (0) target = $region5
    $region4: #{tpu_custom_call.1} parent=1 // pred_region
      _
    $region5: #{tpu_custom_call.1} parent=1 // pred_fallthru
      _
    // Predicated region
    $region6: #{tpu_custom_call.1} parent=1 // pred_check
      _
    $region7: #{tpu_custom_call.1} parent=1 // pred_check_branch
      %18 = sbr.rel (0) target = $region9
    $region8: #{tpu_custom_call.1} parent=1 // pred_region
      _
    $region9: #{tpu_custom_call.1} parent=1 // pred_fallthru
      _
    // Predicated region
    $region10: #{tpu_custom_call.1} parent=1 // pred_check
      _
    $region11: #{tpu_custom_call.1} parent=1 // pred_check_branch
      %20 = sbr.rel (0) target = $region13
    $region12: #{tpu_custom_call.1} parent=1 // pred_region
      _
    $region13: #{tpu_custom_call.1} parent=1 // pred_fallthru
      _
    // Predicated region
    $region14: #{tpu_custom_call.1} parent=1 // pred_check
      _
    $region15: #{tpu_custom_call.1} parent=1 // pred_check_branch
      %22 = sbr.rel (0) target = $region17
    $region16: #{tpu_custom_call.1} parent=1 // pred_region
      _
    $region17: #{tpu_custom_call.1} parent=1 // pred_fallthru
      _
    // Predicated region
    $region18: #{tpu_custom_call.1} parent=1 // pred_check
      _
    $region19: #{tpu_custom_call.1} parent=1 // pred_check_branch
      %24 = sbr.rel (0) target = $region21
    $region20: #{tpu_custom_call.1} parent=1 // pred_region
      _
    $region21: #{tpu_custom_call.1} parent=1 // pred_fallthru
      _
    // Predicated region
    $region22: #{tpu_custom_call.1} parent=1 // pred_check
      _
    $region23: #{tpu_custom_call.1} parent=1 // pred_check_branch
      %26 = sbr.rel (0) target = $region25
    $region24: #{tpu_custom_call.1} parent=1 // pred_region
      _
    $region25: #{tpu_custom_call.1} parent=1 // pred_fallthru
      _
    // Predicated region
    $region26: #{tpu_custom_call.1} parent=1 // pred_check
      _
    $region27: #{tpu_custom_call.1} parent=1 // pred_check_branch
      %28 = sbr.rel (0) target = $region29
    $region28: #{tpu_custom_call.1} parent=1 // pred_region
      _
    $region29: #{tpu_custom_call.1} parent=1 // pred_fallthru
      _
    %v29 = vld [vmem:[%s0] sm:$0xff]
    %v30 = vld [vmem:[%s0 + $0x8] sm:$0xff]
    %v31 = vld [vmem:[%s1] sm:$0xff]
    %v32 = vld [vmem:[%s1 + $0x8] sm:$0xff]
    %v33 = vld [vmem:[%s1 + $0x10] sm:$0xff]
    %v34 = vld [vmem:[%s1 + $0x18] sm:$0xff]
    %v35 = vld [vmem:[%s2] sm:$0xff]
    %v36 = vld [vmem:[%s2 + $0x8] sm:$0xff]
    %v37 = vld [vmem:[%s2 + $0x10] sm:$0xff]
    %v38 = vld [vmem:[%s2 + $0x18] sm:$0xff]
    %40 = vset.pattern.permute.xlu0 0
    %41 = vperm.xlu0 %40, %v35
    %v42 = vpop.permute.xlu0 %41
    %45 = vset.pattern.permute.xlu0 0
    %46 = vperm.xlu0 %45, %v36
    %v47 = vpop.permute.xlu0 %46
    %50 = vset.pattern.permute.xlu0 0
    %51 = vperm.xlu0 %50, %v37
    %v52 = vpop.permute.xlu0 %51
    %55 = vset.pattern.permute.xlu0 0
    %56 = vperm.xlu0 %55, %v38
    %v57 = vpop.permute.xlu0 %56
    %vm59 = vcmask 130048
    %v61 = vsel %vm59, %v31, 0
    %v64 = vsel %vm59, %v32, 0
    %v67 = vsel %vm59, %v33, 0
    %v70 = vsel %vm59, %v34, 0
    %72 = vmatprep.subr.mxu0 0.0
    %73 = vmatpush1.msra.mxu0 %v29
    %74 = vmatprep.subr.mxu0 0.0
    %75 = vmatpush1.msra.mxu0 %v30
    %76 = vmatprep.subr.mxu0 0.0
    %77 = vmatpush1.msra.mxu0 0.0
    %78 = vmatprep.subr.mxu0 0.0
    %79 = vmatpush1.msra.mxu0 0.0
    %80 = vmatprep.subr.mxu0 0.0
    %81 = vmatpush1.msra.mxu0 0.0
    %82 = vmatprep.subr.mxu0 0.0
    %83 = vmatpush1.msra.mxu0 0.0
    %84 = vmatprep.subr.mxu0 0.0
    %85 = vmatpush1.msra.mxu0 0.0
    %86 = vmatprep.subr.mxu0 0.0
    %87 = vmatpush1.msra.mxu0 0.0
    %88 = vmatprep.subr.mxu0 0.0
    %89 = vmatpush1.msra.mxu0 0.0
    %90 = vmatprep.subr.mxu0 0.0
    %91 = vmatpush1.msra.mxu0 0.0
    %92 = vmatprep.subr.mxu0 0.0
    %93 = vmatpush1.msra.mxu0 0.0
    %94 = vmatprep.subr.mxu0 0.0
    %95 = vmatpush1.msra.mxu0 0.0
    %96 = vmatprep.subr.mxu0 0.0
    %97 = vmatpush1.msra.mxu0 0.0
    %98 = vmatprep.subr.mxu0 0.0
    %99 = vmatpush1.msra.mxu0 0.0
    %100 = vmatprep.subr.mxu0 0.0
    %101 = vmatpush1.msra.mxu0 0.0
    %102 = vmatprep.subr.mxu0 0.0
    %103 = vmatpush1.msra.mxu0 0.0
    %104 = vmatprep.subr.mxu0 0.0
    %105 = vmatpush1.msra.mxu0 0.0
    %106 = vmatprep.subr.mxu0 0.0
    %107 = vmatpush1.msra.mxu0 0.0
    %108 = vmatprep.subr.mxu0 0.0
    %109 = vmatpush1.msra.mxu0 0.0
    %110 = vmatprep.subr.mxu0 0.0
    %111 = vmatpush1.msra.mxu0 0.0
    %112 = vmatprep.subr.mxu0 0.0
    %113 = vmatpush1.msra.mxu0 0.0
    %114 = vmatprep.subr.mxu0 0.0
    %115 = vmatpush1.msra.mxu0 0.0
    %116 = vmatprep.subr.mxu0 0.0
    %117 = vmatpush1.msra.mxu0 0.0
    %118 = vmatprep.subr.mxu0 0.0
    %119 = vmatpush1.msra.mxu0 0.0
    %120 = vmatprep.subr.mxu0 0.0
    %121 = vmatpush1.msra.mxu0 0.0
    %122 = vmatprep.subr.mxu0 0.0
    %123 = vmatpush1.msra.mxu0 0.0
    %124 = vmatprep.subr.mxu0 0.0
    %125 = vmatpush1.msra.mxu0 0.0
    %126 = vmatprep.subr.mxu0 0.0
    %127 = vmatpush1.msra.mxu0 0.0
    %128 = vmatprep.subr.mxu0 0.0
    %129 = vmatpush1.msra.mxu0 0.0
    %130 = vmatprep.subr.mxu0 0.0
    %131 = vmatpush1.msra.mxu0 0.0
    %132 = vmatprep.subr.mxu0 0.0
    %133 = vmatpush1.msra.mxu0 0.0
    %134 = vmatprep.subr.mxu0 0.0
    %135 = vmatpush1.msra.mxu0 0.0
    %136 = vmatprep.mubr.f32.mxu0 0.0
    %137 = vmatmul.mubr.f32.gmra.mrb[0].mxu0 %v61
    %v138 = vpop.f32.mrb[0].mxu0
    %v139 = vadd.f32 %v42, %v138
    %v140 = vpop.f32.mrb[0].mxu0
    %141 = vmatprep.mubr.f32.mxu0 0.0
    %142 = vmatmul.mubr.f32.gmra.mrb[0].mxu0 %v64
    %v143 = vpop.f32.mrb[0].mxu0
    %v144 = vadd.f32 %v47, %v143
    %v145 = vpop.f32.mrb[0].mxu0
    %146 = vmatprep.mubr.f32.mxu0 0.0
    %147 = vmatmul.mubr.f32.gmra.mrb[0].mxu0 %v67
    %v148 = vpop.f32.mrb[0].mxu0
    %v149 = vadd.f32 %v52, %v148
    %v150 = vpop.f32.mrb[0].mxu0
    %151 = vmatprep.mubr.f32.mxu0 0.0
    %152 = vmatmul.mubr.f32.gmra.mrb[0].mxu0 %v70
    %v153 = vpop.f32.mrb[0].mxu0
    %v154 = vadd.f32 %v57, %v153
    %v155 = vpop.f32.mrb[0].mxu0
    %156 = vdwg.mxu0
    %v157 = vmul.f32 %v139, 0.5
    %v158 = vmul.f32 %v144, 0.5
    %v159 = vmul.f32 %v149, 0.5
    %v160 = vmul.f32 %v154, 0.5
    %v161 = vmul.f32 %v139, 0.70710677
    %v162 = vmul.f32 %v144, 0.70710677
    %v163 = vmul.f32 %v149, 0.70710677
    %v164 = vmul.f32 %v154, 0.70710677
    %v165 = verf.f32.pop %v161
    %v166 = verf.f32.pop %v162
    %v167 = verf.f32.pop %v163
    %v168 = verf.f32.pop %v164
    %v169 = vadd.f32 %v165, 1.0
    %v170 = vadd.f32 %v166, 1.0
    %v171 = vadd.f32 %v167, 1.0
    %v172 = vadd.f32 %v168, 1.0
    %v173 = vmul.f32 %v157, %v169
    %v174 = vmul.f32 %v158, %v170
    %v175 = vmul.f32 %v159, %v171
    %v176 = vmul.f32 %v160, %v172
    %v177 = vld [vmem:[%s3] sm:$0xff]
    %v178 = vld [vmem:[%s3 + $0x8] sm:$0xff]
    %v179 = vld [vmem:[%s3 + $0x10] sm:$0xff]
    %v180 = vld [vmem:[%s3 + $0x18] sm:$0xff]
    %v181 = vld [vmem:[%s4] sm:$0xff]
    %v182 = vld [vmem:[%s4 + $0x8] sm:$0xff]
    %v183 = vld [vmem:[%s4 + $0x10] sm:$0xff]
    %v184 = vld [vmem:[%s4 + $0x18] sm:$0xff]
    %186 = vset.pattern.permute.xlu0 0
    %187 = vperm.xlu0 %186, %v181
    %v188 = vpop.permute.xlu0 %187
    %191 = vset.pattern.permute.xlu0 0
    %192 = vperm.xlu0 %191, %v182
    %v193 = vpop.permute.xlu0 %192
    %196 = vset.pattern.permute.xlu0 0
    %197 = vperm.xlu0 %196, %v183
    %v198 = vpop.permute.xlu0 %197
    %201 = vset.pattern.permute.xlu0 0
    %202 = vperm.xlu0 %201, %v184
    %v203 = vpop.permute.xlu0 %202
    %vm205 = vcmask 261120
    %v207 = vsel %vm205, %v177, 0
    %v210 = vsel %vm205, %v178, 0
    %v213 = vsel %vm205, %v179, 0
    %v216 = vsel %vm205, %v180, 0
    %218 = vmatprep.subr.mxu0 0.0
    %219 = vmatpush1.msra.mxu0 %v173
    %220 = vmatprep.subr.mxu0 0.0
    %221 = vmatpush1.msra.mxu0 %v174
    %222 = vmatprep.subr.mxu0 0.0
    %223 = vmatpush1.msra.mxu0 %v175
    %224 = vmatprep.subr.mxu0 0.0
    %225 = vmatpush1.msra.mxu0 %v176
    %226 = vmatprep.subr.mxu0 0.0
    %227 = vmatpush1.msra.mxu0 0.0
    %228 = vmatprep.subr.mxu0 0.0
    %229 = vmatpush1.msra.mxu0 0.0
    %230 = vmatprep.subr.mxu0 0.0
    %231 = vmatpush1.msra.mxu0 0.0
    %232 = vmatprep.subr.mxu0 0.0
    %233 = vmatpush1.msra.mxu0 0.0
    %234 = vmatprep.subr.mxu0 0.0
    %235 = vmatpush1.msra.mxu0 0.0
    %236 = vmatprep.subr.mxu0 0.0
    %237 = vmatpush1.msra.mxu0 0.0
    %238 = vmatprep.subr.mxu0 0.0
    %239 = vmatpush1.msra.mxu0 0.0
    %240 = vmatprep.subr.mxu0 0.0
    %241 = vmatpush1.msra.mxu0 0.0
    %242 = vmatprep.subr.mxu0 0.0
    %243 = vmatpush1.msra.mxu0 0.0
    %244 = vmatprep.subr.mxu0 0.0
    %245 = vmatpush1.msra.mxu0 0.0
    %246 = vmatprep.subr.mxu0 0.0
    %247 = vmatpush1.msra.mxu0 0.0
    %248 = vmatprep.subr.mxu0 0.0
    %249 = vmatpush1.msra.mxu0 0.0
    %250 = vmatprep.subr.mxu0 0.0
    %251 = vmatpush1.msra.mxu0 0.0
    %252 = vmatprep.subr.mxu0 0.0
    %253 = vmatpush1.msra.mxu0 0.0
    %254 = vmatprep.subr.mxu0 0.0
    %255 = vmatpush1.msra.mxu0 0.0
    %256 = vmatprep.subr.mxu0 0.0
    %257 = vmatpush1.msra.mxu0 0.0
    %258 = vmatprep.subr.mxu0 0.0
    %259 = vmatpush1.msra.mxu0 0.0
    %260 = vmatprep.subr.mxu0 0.0
    %261 = vmatpush1.msra.mxu0 0.0
    %262 = vmatprep.subr.mxu0 0.0
    %263 = vmatpush1.msra.mxu0 0.0
    %264 = vmatprep.subr.mxu0 0.0
    %265 = vmatpush1.msra.mxu0 0.0
    %266 = vmatprep.subr.mxu0 0.0
    %267 = vmatpush1.msra.mxu0 0.0
    %268 = vmatprep.subr.mxu0 0.0
    %269 = vmatpush1.msra.mxu0 0.0
    %270 = vmatprep.subr.mxu0 0.0
    %271 = vmatpush1.msra.mxu0 0.0
    %272 = vmatprep.subr.mxu0 0.0
    %273 = vmatpush1.msra.mxu0 0.0
    %274 = vmatprep.subr.mxu0 0.0
    %275 = vmatpush1.msra.mxu0 0.0
    %276 = vmatprep.subr.mxu0 0.0
    %277 = vmatpush1.msra.mxu0 0.0
    %278 = vmatprep.subr.mxu0 0.0
    %279 = vmatpush1.msra.mxu0 0.0
    %280 = vmatprep.subr.mxu0 0.0
    %281 = vmatpush1.msra.mxu0 0.0
    %282 = vmatprep.mubr.f32.mxu0 0.0
    %283 = vmatmul.mubr.f32.gmra.mrb[0].mxu0 %v207
    %v284 = vpop.f32.mrb[0].mxu0
    %v285 = vadd.f32 %v188, %v284
    %v286 = vpop.f32.mrb[0].mxu0
    %287 = vmatprep.mubr.f32.mxu0 0.0
    %288 = vmatmul.mubr.f32.gmra.mrb[0].mxu0 %v210
    %v289 = vpop.f32.mrb[0].mxu0
    %v290 = vadd.f32 %v193, %v289
    %v291 = vpop.f32.mrb[0].mxu0
    %292 = vmatprep.mubr.f32.mxu0 0.0
    %293 = vmatmul.mubr.f32.gmra.mrb[0].mxu0 %v213
    %v294 = vpop.f32.mrb[0].mxu0
    %v295 = vadd.f32 %v198, %v294
    %v296 = vpop.f32.mrb[0].mxu0
    %297 = vmatprep.mubr.f32.mxu0 0.0
    %298 = vmatmul.mubr.f32.gmra.mrb[0].mxu0 %v216
    %v299 = vpop.f32.mrb[0].mxu0
    %v300 = vadd.f32 %v203, %v299
    %v301 = vpop.f32.mrb[0].mxu0
    %302 = vdwg.mxu0
    %v303 = vmul.f32 %v285, 0.5
    %v304 = vmul.f32 %v290, 0.5
    %v305 = vmul.f32 %v295, 0.5
    %v306 = vmul.f32 %v300, 0.5
    %v307 = vmul.f32 %v285, 0.70710677
    %v308 = vmul.f32 %v290, 0.70710677
    %v309 = vmul.f32 %v295, 0.70710677
    %v310 = vmul.f32 %v300, 0.70710677
    %v311 = verf.f32.pop %v307
    %v312 = verf.f32.pop %v308
    %v313 = verf.f32.pop %v309
    %v314 = verf.f32.pop %v310
    %v315 = vadd.f32 %v311, 1.0
    %v316 = vadd.f32 %v312, 1.0
    %v317 = vadd.f32 %v313, 1.0
    %v318 = vadd.f32 %v314, 1.0
    %v319 = vmul.f32 %v303, %v315
    %v320 = vmul.f32 %v304, %v316
    %v321 = vmul.f32 %v305, %v317
    %v322 = vmul.f32 %v306, %v318
    %v323 = vld [vmem:[%s5] sm:$0x1]
    %v324 = vld [vmem:[#allocation2] sm:$0x1]
    %326 = vset.pattern.permute.xlu0 0
    %327 = vperm.xlu0 %326, %v324
    %v328 = vpop.permute.xlu0 %327
    %v330 = vlaneseq
    %v331 = vshrl.u32 %v330, 7
    %v332 = vsub.s32 0, %v331
    %v333 = vrot.slane %v328, %v332
    %v335 = vsel %vm205, %v323, 0
    %337 = vmatprep.subr.mxu0 0.0
    %338 = vmatpush1.msra.mxu0 %v319
    %339 = vmatprep.subr.mxu0 0.0
    %340 = vmatpush1.msra.mxu0 %v320
    %341 = vmatprep.subr.mxu0 0.0
    %342 = vmatpush1.msra.mxu0 %v321
    %343 = vmatprep.subr.mxu0 0.0
    %344 = vmatpush1.msra.mxu0 %v322
    %345 = vmatprep.subr.mxu0 0.0
    %346 = vmatpush1.msra.mxu0 0.0
    %347 = vmatprep.subr.mxu0 0.0
    %348 = vmatpush1.msra.mxu0 0.0
    %349 = vmatprep.subr.mxu0 0.0
    %350 = vmatpush1.msra.mxu0 0.0
    %351 = vmatprep.subr.mxu0 0.0
    %352 = vmatpush1.msra.mxu0 0.0
    %353 = vmatprep.subr.mxu0 0.0
    %354 = vmatpush1.msra.mxu0 0.0
    %355 = vmatprep.subr.mxu0 0.0
    %356 = vmatpush1.msra.mxu0 0.0
    %357 = vmatprep.subr.mxu0 0.0
    %358 = vmatpush1.msra.mxu0 0.0
    %359 = vmatprep.subr.mxu0 0.0
    %360 = vmatpush1.msra.mxu0 0.0
    %361 = vmatprep.subr.mxu0 0.0
    %362 = vmatpush1.msra.mxu0 0.0
    %363 = vmatprep.subr.mxu0 0.0
    %364 = vmatpush1.msra.mxu0 0.0
    %365 = vmatprep.subr.mxu0 0.0
    %366 = vmatpush1.msra.mxu0 0.0
    %367 = vmatprep.subr.mxu0 0.0
    %368 = vmatpush1.msra.mxu0 0.0
    %369 = vmatprep.subr.mxu0 0.0
    %370 = vmatpush1.msra.mxu0 0.0
    %371 = vmatprep.subr.mxu0 0.0
    %372 = vmatpush1.msra.mxu0 0.0
    %373 = vmatprep.subr.mxu0 0.0
    %374 = vmatpush1.msra.mxu0 0.0
    %375 = vmatprep.subr.mxu0 0.0
    %376 = vmatpush1.msra.mxu0 0.0
    %377 = vmatprep.subr.mxu0 0.0
    %378 = vmatpush1.msra.mxu0 0.0
    %379 = vmatprep.subr.mxu0 0.0
    %380 = vmatpush1.msra.mxu0 0.0
    %381 = vmatprep.subr.mxu0 0.0
    %382 = vmatpush1.msra.mxu0 0.0
    %383 = vmatprep.subr.mxu0 0.0
    %384 = vmatpush1.msra.mxu0 0.0
    %385 = vmatprep.subr.mxu0 0.0
    %386 = vmatpush1.msra.mxu0 0.0
    %387 = vmatprep.subr.mxu0 0.0
    %388 = vmatpush1.msra.mxu0 0.0
    %389 = vmatprep.subr.mxu0 0.0
    %390 = vmatpush1.msra.mxu0 0.0
    %391 = vmatprep.subr.mxu0 0.0
    %392 = vmatpush1.msra.mxu0 0.0
    %393 = vmatprep.subr.mxu0 0.0
    %394 = vmatpush1.msra.mxu0 0.0
    %395 = vmatprep.subr.mxu0 0.0
    %396 = vmatpush1.msra.mxu0 0.0
    %397 = vmatprep.subr.mxu0 0.0
    %398 = vmatpush1.msra.mxu0 0.0
    %399 = vmatprep.subr.mxu0 0.0
    %400 = vmatpush1.msra.mxu0 0.0
    %401 = vmatprep.mubr.f32.mxu0 0.0
    %402 = vmatmul.mubr.f32.gmra.mrb[0].mxu0 %v335
    %v403 = vpop.f32.mrb[0].mxu0
    %v404 = vadd.f32 %v333, %v403
    %v405 = vpop.f32.mrb[0].mxu0
    %406 = vdwg.mxu0
    %v407 = vsub.f32 0.0, %v404
    %v408 = vmul.f32 %v407, 1.442695
    %v409 = vpow.pop %v408
    %v410 = vadd.f32 %v409, 1.0
    %v411 = vrcp.pop %v410
    %412 = vst [vmem:[#allocation3] sm:$0x1] %v411
    // Predicated region
    $region30: #{tpu_custom_call.1} parent=1 // pred_check
      _
    $region31: #{tpu_custom_call.1} parent=1 // pred_check_branch
      %414 = sbr.rel (0) target = $region33
    $region32: #{tpu_custom_call.1} parent=1 // pred_region
      %s416 = ssub.s32 16, 16
      %417 = vsyncadd [#allocation4], %s416
      %s419 = sshll.u32 [#allocation3], 4
      %s420 = int_to_ptr.vmem [resolvable:$true] %s419
      %422 = dma.vmem_to_hbm [thread:$0]  %s420, 16, %s7, [#allocation4]
    $region33: #{tpu_custom_call.1} parent=1 // pred_fallthru
      _
    // Predicated region
    $region34: #{tpu_custom_call.1} parent=1 // pred_check
      _
    $region35: #{tpu_custom_call.1} parent=1 // pred_check_branch
      %424 = sbr.rel (0) target = $region37
    $region36: #{tpu_custom_call.1} parent=1 // pred_region
      %425 = dma.done [#allocation4], 16
    $region37: #{tpu_custom_call.1} parent=1 // pred_fallthru
      _
    %426 = vsyncpa [#allocation4], 1

</llo_original>
